<compile_context>
chip_gen: v5e
topology: v5e:2x2
jax: 0.10.0
libtpu: 0.0.40
codegen_flags: <defaults>
</compile_context>

<pallas_src>
import functools

import jax
import jax.numpy as jnp
import numpy as np
from jax.experimental import pallas as pl
from jax.experimental.pallas import tpu as pltpu

LANE = 128
SUBLANE = 8


def _round_up(x: int, m: int) -> int:
    return ((x + m - 1) // m) * m


def _pad2(a, rows: int, cols: int):
    r, c = a.shape
    if r == rows and c == cols:
        return a
    return jnp.pad(a, ((0, rows - r), (0, cols - c)))


@functools.lru_cache(maxsize=None)
def _vmem_budget_and_limit():
    """(tile budget bytes, vmem_limit_bytes) derived from this chip's VMEM.

    v5e/v6e: 128 MiB physical per core, v7x: 64 MiB per TensorCore. We let
    Mosaic use half of physical VMEM and size our own tiles to <= ~64% of that
    so double-buffering + compiler internal scratch always fit.
    """
    try:
        phys = int(pltpu.get_tpu_info().vmem_capacity_bytes)
    except Exception:  # conservative fallback = smallest current part (v7x TC)
        phys = 64 * 1024 * 1024
    limit = phys // 2
    budget = min(limit * 3 // 4, 32 * 1024 * 1024)
    return budget, limit


# ----------------------------------------------------------------------------
# Pallas kernels
# ----------------------------------------------------------------------------
def _mlp_forward_kernel(d_out, x_ref, w1t_ref, b1_ref, w2t_ref, b2_ref, o_ref):
    """Fused Linear -> ReLU -> Linear on one (tm, d_in_p) batch tile.

    Weights/biases use a constant index_map (VMEM-resident across the batch
    grid); activations are pipelined. Matmul inputs are bf16, accumulation and
    the bias/ReLU epilogue are f32.
    """
    x = x_ref[...].astype(w1t_ref.dtype)                      # bf16 for the MXU
    h = jnp.dot(x, w1t_ref[...], preferred_element_type=jnp.float32)
    h = jnp.maximum(h + b1_ref[...], 0.0)                     # f32 epilogue
    y = jnp.dot(h.astype(w2t_ref.dtype), w2t_ref[...],
                preferred_element_type=jnp.float32)
    y = y + b2_ref[...]
    if d_out != y.shape[-1]:                                  # drop lane padding
        y = y[:, :d_out]
    o_ref[...] = y.astype(o_ref.dtype)


def _grad_avg_kernel(inv_world_size, g_ref, o_ref):
    """grad_avg_hook semantics on one (W, tr, C) lane-dense tile.

    Replica axis is leading (non-lane) -> W-1 plain VPU vector adds per vreg;
    the 1/world_size scale is folded into the single multiply before the store.
    """
    # TODO(synk): a true multi-device all_reduce would be a ring/blast of
    # pltpu.make_async_remote_copy + pl.semaphore_* (collective_id barrier),
    # one ring step interleaved per grid iteration with the local add; here the
    # replica axis is materialized as a leading dim and reduced on one chip.
    g = g_ref[...].astype(jnp.float32)
    o_ref[...] = (jnp.sum(g, axis=0) * inv_world_size).astype(o_ref.dtype)


# ----------------------------------------------------------------------------
# Wrapped module: Pallas MLP with init-time weight preprocessing
# ----------------------------------------------------------------------------
class PallasMLP:
    """2-layer MLP. PyTorch-convention params: w1 [H, D_in], b1 [H],
    w2 [D_out, H], b2 [D_out]. Transpose + lane padding + bf16 cast happen
    once, here (never on the per-call hot path)."""

    def __init__(self, w1, b1, w2, b2, *, tile_m_max: int = 512,
                 compute_dtype=jnp.bfloat16):
        self.d_in = int(w1.shape[1])
        self.h = int(w1.shape[0])
        self.d_out = int(w2.shape[0])
        self.tile_m_max = int(tile_m_max)

        self._d_in_p = _round_up(self.d_in, LANE)
        self._h_p = _round_up(self.h, LANE)
        self._d_out_p = _round_up(self.d_out, LANE)

        # Pre-transpose, zero-pad to lane multiples, cast matmul inputs to bf16
        # ONCE. Biases stay f32 (added in the f32 epilogue).
        self.w1t = _pad2(jnp.asarray(w1).T, self._d_in_p, self._h_p).astype(compute_dtype)
        self.w2t = _pad2(jnp.asarray(w2).T, self._h_p, self._d_out_p).astype(compute_dtype)
        self.b1 = _pad2(jnp.asarray(b1).reshape(1, -1), 1, self._h_p).astype(jnp.float32)
        self.b2 = _pad2(jnp.asarray(b2).reshape(1, -1), 1, self._d_out_p).astype(jnp.float32)

        self._params = {"w1": jnp.asarray(w1), "b1": jnp.asarray(b1),
                        "w2": jnp.asarray(w2), "b2": jnp.asarray(b2)}

        self._vmem_budget, self._vmem_limit = _vmem_budget_and_limit()
        self._single_buffer_ok = None   # resolved on first call

    def state_dict(self):
        return dict(self._params)

    # -- tile selection -------------------------------------------------------
    def _choose_tile_m(self, B: int, in_itemsize: int, out_itemsize: int) -> int:
        if B <= SUBLANE:
            return B
        # Resident weights/biases, counted double-buffered (worst case if
        # single buffering is unavailable). On v7x each of the 2 TensorCores
        # keeps its own copy in its 64 MiB VMEM.
        fixed = 2 * (self.w1t.size * self.w1t.dtype.itemsize
                     + self.w2t.size * self.w2t.dtype.itemsize
                     + self.b1.size * self.b1.dtype.itemsize
                     + self.b2.size * self.b2.dtype.itemsize)
        per_row = (2 * self._d_in_p * in_itemsize     # x tile, double buffered
                   + 2 * self.d_out * out_itemsize    # out tile, double buffered
                   + 2 * self._d_in_p                 # bf16 cast of x
                   + 6 * self._h_p                    # f32 hidden + bf16 cast
                   + 4 * self._d_out_p)               # f32 result before downcast
        avail = int(0.85 * self._vmem_budget) - fixed
        # TODO(synk): for very wide layers (weights alone near the VMEM budget)
        # add an output-feature grid axis so only (d_in_p, tn)/(h_p, tn) weight
        # slabs are resident instead of the full matrices.
        tm = max(SUBLANE, (max(avail, 0) // per_row) // SUBLANE * SUBLANE)
        tm = min(tm, self.tile_m_max)
        if tm >= B:
            tm = B
            if B >= 2 * SUBLANE:           # >=2 "parallel" steps -> v7x megacore
                half = _round_up((B + 1) // 2, SUBLANE)
                if half < B:
                    tm = half
        return tm

    # -- forward --------------------------------------------------------------
    def __call__(self, x):
        B, d_in = x.shape
        assert d_in == self.d_in, (d_in, self.d_in)

        # Pad only the lane (feature) dim, and only when needed. The batch dim
        # is never padded: the ragged last tile uses Pallas masked stores, so
        # there is no pad + slice pass over the activations in HBM.
        if d_in != self._d_in_p:
            x_k = jnp.pad(x, ((0, 0), (0, self._d_in_p - d_in)))
        else:
            x_k = x

        in_item = x.dtype.itemsize
        out_item = x.dtype.itemsize
        tm = self._choose_tile_m(B, in_item, out_item)
        grid = (pl.cdiv(B, tm),)

        kernel = functools.partial(_mlp_forward_kernel, self.d_out)
        weight_bytes = (self.w1t.size * self.w1t.dtype.itemsize
                        + self.w2t.size * self.w2t.dtype.itemsize
                        + self.b1.size * self.b1.dtype.itemsize
                        + self.b2.size * self.b2.dtype.itemsize)
        cost = pl.CostEstimate(
            flops=2 * B * (self._d_in_p * self._h_p + self._h_p * self._d_out_p),
            transcendentals=0,
            bytes_accessed=int(B * self._d_in_p * in_item + weight_bytes
                               + B * self.d_out * out_item))

        d_in_p, h_p, d_out_p, d_out = self._d_in_p, self._h_p, self._d_out_p, self.d_out

        def build(single_buffered_weights: bool):
            if single_buffered_weights:
                # Constant-index blocks never change: single buffer saves VMEM.
                res = lambda shape: pl.BlockSpec(shape, lambda i: (0, 0),
                                                 pipeline_mode=pl.Buffered(1))
            else:
                res = lambda shape: pl.BlockSpec(shape, lambda i: (0, 0))
            return pl.pallas_call(
                kernel,
                out_shape=jax.ShapeDtypeStruct((B, d_out), x.dtype),
                grid=grid,
                in_specs=[
                    pl.BlockSpec((tm, d_in_p), lambda i: (i, 0)),  # activations: tiled
                    res((d_in_p, h_p)),                            # weights: resident
                    res((1, h_p)),
                    res((h_p, d_out_p)),
                    res((1, d_out_p)),
                ],
                out_specs=pl.BlockSpec((tm, d_out), lambda i: (i, 0)),
                compiler_params=pltpu.CompilerParams(
                    dimension_semantics=("parallel",),
                    vmem_limit_bytes=self._vmem_limit),
                cost_estimate=cost,
            )

        args = (x_k, self.w1t, self.b1, self.w2t, self.b2)
        if self._single_buffer_ok is None:
            try:
                out = jax.block_until_ready(build(True)(*args))
                self._single_buffer_ok = True
                return out
            except Exception:
                # This jax build does not accept Buffered(1); fall back once.
                self._single_buffer_ok = False
        if self._single_buffer_ok:
            return build(True)(*args)
        return build(False)(*args)


# ----------------------------------------------------------------------------
# Gradient-averaging hook (lane-dense, VMEM-budgeted tiles)
# ----------------------------------------------------------------------------
def _grad_rows_per_tile(W: int, R: int, C: int, itemsize: int, budget: int) -> int:
    # Per-row VMEM: double-buffered input (W*C) + double-buffered output (C)
    # + a conservative f32 temp for the cast/accumulate (W*C*4).
    per_row = 2 * W * C * itemsize + 2 * C * itemsize + W * C * 4
    tr = int(0.85 * budget) // per_row
    if tr >= R:
        tr = R
        if R >= 2 * SUBLANE:               # >=2 "parallel" steps (v7x megacore)
            half = _round_up((R + 1) // 2, SUBLANE)
            if half < R:
                tr = half
    else:
        tr = max(SUBLANE, (tr // SUBLANE) * SUBLANE)
    return min(tr, R)


def grad_avg(stacked_grads, world_size: int, *, lane_cols: int | None = None):
    """Implements grad_avg_hook: sum over the replica axis, divide by world_size.

    stacked_grads: [world_size, *grad_shape]. Each replica gradient is flattened
    into a lane-dense slab whose last dim is a large multiple of 128 (tail pad
    only), so every output store is a full-width unmasked vst even for narrow
    gradients (e.g. bias grads). Row tiles are sized from the chip's VMEM budget.
    """
    assert stacked_grads.ndim >= 2
    W = stacked_grads.shape[0]
    assert W == world_size
    grad_shape = stacked_grads.shape[1:]
    dtype = stacked_grads.dtype
    itemsize = dtype.itemsize
    budget, limit = _vmem_budget_and_limit()

    if lane_cols is None:
        lane_cols = 2048 if world_size <= 4 else 1024

    flat = stacked_grads.reshape(W, -1)
    L = flat.shape[1]
    C = min(lane_cols, _round_up(L, LANE))
    Lp = _round_up(L, C)
    if Lp != L:
        flat = jnp.pad(flat, ((0, 0), (0, Lp - L)))
    R = Lp // C
    slab = flat.reshape(W, R, C)

    tr = _grad_rows_per_tile(W, R, C, itemsize, budget)
    grid = (pl.cdiv(R, tr),)
    cost = pl.CostEstimate(flops=W * Lp, transcendentals=0,
                           bytes_accessed=(W + 1) * Lp * itemsize)

    out = pl.pallas_call(
        functools.partial(_grad_avg_kernel, 1.0 / float(world_size)),
        out_shape=jax.ShapeDtypeStruct((R, C), dtype),
        grid=grid,
        in_specs=[pl.BlockSpec((W, tr, C), lambda i: (0, i, 0))],
        out_specs=pl.BlockSpec((tr, C), lambda i: (i, 0)),
        compiler_params=pltpu.CompilerParams(
            dimension_semantics=("parallel",),
            vmem_limit_bytes=limit),
        cost_estimate=cost,
    )(slab)

    flat_out = out.reshape(-1)
    if Lp != L:
        flat_out = flat_out[:L]
    return flat_out.reshape(grad_shape)


# ----------------------------------------------------------------------------
# CustomDDP wrapper
# ----------------------------------------------------------------------------
class CustomDDP:
    """JAX analogue of the PyTorch CustomDDP wrapper: __call__ delegates to the
    wrapped module; the post-accumulate grad hook is exposed as average_grads."""

    def __init__(self, module, world_size: int):
        self.module = module
        self.world_size = world_size

    def __call__(self, *inputs, **kwargs):
        return self.module(*inputs, **kwargs)

    def average_grads(self, stacked_grads):
        return grad_avg(stacked_grads, self.world_size)

    def state_dict(self, *args, **kwargs):
        return self.module.state_dict(*args, **kwargs)


# ----------------------------------------------------------------------------
# Demo
# ----------------------------------------------------------------------------
if __name__ == "__main__":
    key = jax.random.PRNGKey(0)
    k_x, k_w1, k_b1, k_w2, k_b2, k_g = jax.random.split(key, 6)

    B, D_IN, HIDDEN, D_OUT = 8, 32, 64, 32
    WORLD_SIZE = 4

    x = jax.random.normal(k_x, (B, D_IN), dtype=jnp.float32)
    w1 = jax.random.normal(k_w1, (HIDDEN, D_IN), dtype=jnp.float32) * 0.1
    b1 = jax.random.normal(k_b1, (HIDDEN,), dtype=jnp.float32) * 0.1
    w2 = jax.random.normal(k_w2, (D_OUT, HIDDEN), dtype=jnp.float32) * 0.1
    b2 = jax.random.normal(k_b2, (D_OUT,), dtype=jnp.float32) * 0.1

    mlp = PallasMLP(w1, b1, w2, b2)
    ddp = CustomDDP(mlp, world_size=WORLD_SIZE)

    # Forward pass (CustomDDP.forward == wrapped module forward).
    y = jax.block_until_ready(ddp(x))

    # Reference check (bf16 MXU inputs, f32 accumulation -> loosened tolerance).
    h_ref = jnp.maximum(x @ w1.T + b1, 0.0)
    y_ref = h_ref @ w2.T + b2
    np.testing.assert_allclose(np.asarray(y), np.asarray(y_ref), rtol=3e-2, atol=3e-2)

    # Gradient-averaging hook semantics on simulated per-replica gradients.
    stacked_grads = jax.random.normal(
        k_g, (WORLD_SIZE, HIDDEN, D_IN), dtype=jnp.float32)
    g_avg = jax.block_until_ready(ddp.average_grads(stacked_grads))
    g_ref = jnp.sum(stacked_grads, axis=0) / WORLD_SIZE
    np.testing.assert_allclose(np.asarray(g_avg), np.asarray(g_ref), rtol=1e-5, atol=1e-5)

    print("KERNEL_OK")
</pallas_src>

<mosaic_0001>
module attributes {stable_mosaic.version = 11 : i64} {
  func.func @_mlp_forward_kernel(%arg0: i32, %arg1: memref<8x128xf32, #tpu.memory_space<vmem>>, %arg2: memref<128x128xbf16, #tpu.memory_space<vmem>>, %arg3: memref<1x128xf32, #tpu.memory_space<vmem>>, %arg4: memref<128x128xbf16, #tpu.memory_space<vmem>>, %arg5: memref<1x128xf32, #tpu.memory_space<vmem>>, %arg6: memref<8x32xf32, #tpu.memory_space<vmem>>) attributes {dimension_semantics = [#tpu.dimension_semantics<parallel>], iteration_bounds = array<i64: 1>, scalar_prefetch = 0 : i64, scratch_operands = 0 : i64, tpu.core_type = #tpu.core_type<tc>, window_params = [{transform_indices = @transform_0, window_bounds = array<i64: 8, 128>}, {pipeline_mode = #tpu.pipeline_mode<synchronous>, transform_indices = @transform_1, window_bounds = array<i64: 128, 128>}, {pipeline_mode = #tpu.pipeline_mode<synchronous>, transform_indices = @transform_2, window_bounds = array<i64: 1, 128>}, {pipeline_mode = #tpu.pipeline_mode<synchronous>, transform_indices = @transform_3, window_bounds = array<i64: 128, 128>}, {pipeline_mode = #tpu.pipeline_mode<synchronous>, transform_indices = @transform_4, window_bounds = array<i64: 1, 128>}, {transform_indices = @transform_5, window_bounds = array<i64: 8, 32>}]} {
    %c0 = arith.constant 0 : index
    %c0_0 = arith.constant 0 : index
    %0 = vector.load %arg1[%c0, %c0_0] : memref<8x128xf32, #tpu.memory_space<vmem>>, vector<8x128xf32>
    %1 = arith.truncf %0 : vector<8x128xf32> to vector<8x128xbf16>
    %c0_1 = arith.constant 0 : index
    %c0_2 = arith.constant 0 : index
    %2 = vector.load %arg2[%c0_1, %c0_2] : memref<128x128xbf16, #tpu.memory_space<vmem>>, vector<128x128xbf16>
    %cst = arith.constant dense<0.000000e+00> : vector<8x128xf32>
    %3 = tpu.matmul %1, %2, %cst {dimension_numbers = #tpu.dot_dimension_numbers<[1], [0], [0], [1], [0, 0, 1, 1], [], []>} : vector<8x128xbf16>, vector<128x128xbf16>, vector<8x128xf32> -> vector<8x128xf32>
    %c0_3 = arith.constant 0 : index
    %c0_4 = arith.constant 0 : index
    %4 = vector.load %arg3[%c0_3, %c0_4] : memref<1x128xf32, #tpu.memory_space<vmem>>, vector<1x128xf32>
    %5 = vector.broadcast %4 : vector<1x128xf32> to vector<8x128xf32>
    %6 = arith.addf %3, %5 : vector<8x128xf32>
    %cst_5 = arith.constant 0.000000e+00 : f32
    %7 = vector.broadcast %cst_5 : f32 to vector<8x128xf32>
    %8 = arith.maximumf %6, %7 : vector<8x128xf32>
    %9 = arith.truncf %8 : vector<8x128xf32> to vector<8x128xbf16>
    %c0_6 = arith.constant 0 : index
    %c0_7 = arith.constant 0 : index
    %10 = vector.load %arg4[%c0_6, %c0_7] : memref<128x128xbf16, #tpu.memory_space<vmem>>, vector<128x128xbf16>
    %cst_8 = arith.constant dense<0.000000e+00> : vector<8x128xf32>
    %11 = tpu.matmul %9, %10, %cst_8 {dimension_numbers = #tpu.dot_dimension_numbers<[1], [0], [0], [1], [0, 0, 1, 1], [], []>} : vector<8x128xbf16>, vector<128x128xbf16>, vector<8x128xf32> -> vector<8x128xf32>
    %c0_9 = arith.constant 0 : index
    %c0_10 = arith.constant 0 : index
    %12 = vector.load %arg5[%c0_9, %c0_10] : memref<1x128xf32, #tpu.memory_space<vmem>>, vector<1x128xf32>
    %13 = vector.broadcast %12 : vector<1x128xf32> to vector<8x128xf32>
    %14 = arith.addf %11, %13 : vector<8x128xf32>
    %15 = vector.extract_strided_slice %14 {offsets = [0, 0], sizes = [8, 32], strides = [1, 1]} : vector<8x128xf32> to vector<8x32xf32>
    %c0_11 = arith.constant 0 : index
    %c0_12 = arith.constant 0 : index
    %16 = vector.load %arg6[%c0_11, %c0_12] : memref<8x32xf32, #tpu.memory_space<vmem>>, vector<8x32xf32>
    tpu.vector_store %arg6[%c0_11, %c0_12], %15 {strides = array<i32>} : memref<8x32xf32, #tpu.memory_space<vmem>>, vector<8x32xf32>,
    return
  }
  func.func @transform_0(%arg0: i32) -> (i32, i32) {
    %c0_i32 = arith.constant 0 : i32
    %c0_i32_0 = arith.constant 0 : i32
    return %arg0, %c0_i32 : i32, i32
  }
  func.func @transform_1(%arg0: i32) -> (i32, i32) {
    %c0_i32 = arith.constant 0 : i32
    %c0_i32_0 = arith.constant 0 : i32
    %c0_i32_1 = arith.constant 0 : i32
    return %c0_i32, %c0_i32_0 : i32, i32
  }
  func.func @transform_2(%arg0: i32) -> (i32, i32) {
    %c0_i32 = arith.constant 0 : i32
    %c0_i32_0 = arith.constant 0 : i32
    %c0_i32_1 = arith.constant 0 : i32
    return %c0_i32, %c0_i32_0 : i32, i32
  }
  func.func @transform_3(%arg0: i32) -> (i32, i32) {
    %c0_i32 = arith.constant 0 : i32
    %c0_i32_0 = arith.constant 0 : i32
    %c0_i32_1 = arith.constant 0 : i32
    return %c0_i32, %c0_i32_0 : i32, i32
  }
  func.func @transform_4(%arg0: i32) -> (i32, i32) {
    %c0_i32 = arith.constant 0 : i32
    %c0_i32_0 = arith.constant 0 : i32
    %c0_i32_1 = arith.constant 0 : i32
    return %c0_i32, %c0_i32_0 : i32, i32
  }
  func.func @transform_5(%arg0: i32) -> (i32, i32) {
    %c0_i32 = arith.constant 0 : i32
    %c0_i32_0 = arith.constant 0 : i32
    return %arg0, %c0_i32 : i32, i32
  }
}

module attributes {stable_mosaic.version = 11 : i64} {
  func.func @_mlp_forward_kernel(%arg0: i32, %arg1: memref<8x128xf32, #tpu.memory_space<vmem>>, %arg2: memref<128x128xbf16, #tpu.memory_space<vmem>>, %arg3: memref<1x128xf32, #tpu.memory_space<vmem>>, %arg4: memref<128x128xbf16, #tpu.memory_space<vmem>>, %arg5: memref<1x128xf32, #tpu.memory_space<vmem>>, %arg6: memref<8x32xf32, #tpu.memory_space<vmem>>) attributes {dimension_semantics = [#tpu.dimension_semantics<parallel>], iteration_bounds = array<i64: 1>, scalar_prefetch = 0 : i64, scratch_operands = 0 : i64, tpu.core_type = #tpu.core_type<tc>, window_params = [{transform_indices = @transform_0, window_bounds = array<i64: 8, 128>}, {pipeline_mode = #tpu.pipeline_mode<synchronous>, transform_indices = @transform_1, window_bounds = array<i64: 128, 128>}, {pipeline_mode = #tpu.pipeline_mode<synchronous>, transform_indices = @transform_2, window_bounds = array<i64: 1, 128>}, {pipeline_mode = #tpu.pipeline_mode<synchronous>, transform_indices = @transform_3, window_bounds = array<i64: 128, 128>}, {pipeline_mode = #tpu.pipeline_mode<synchronous>, transform_indices = @transform_4, window_bounds = array<i64: 1, 128>}, {transform_indices = @transform_5, window_bounds = array<i64: 8, 32>}]} {
    %c0 = arith.constant 0 : index
    %c0_0 = arith.constant 0 : index
    %0 = vector.load %arg1[%c0, %c0_0] : memref<8x128xf32, #tpu.memory_space<vmem>>, vector<8x128xf32>
    %1 = arith.truncf %0 : vector<8x128xf32> to vector<8x128xbf16>
    %c0_1 = arith.constant 0 : index
    %c0_2 = arith.constant 0 : index
    %2 = vector.load %arg2[%c0_1, %c0_2] : memref<128x128xbf16, #tpu.memory_space<vmem>>, vector<128x128xbf16>
    %cst = arith.constant dense<0.000000e+00> : vector<8x128xf32>
    %3 = tpu.matmul %1, %2, %cst {dimension_numbers = #tpu.dot_dimension_numbers<[1], [0], [0], [1], [0, 0, 1, 1], [], []>} : vector<8x128xbf16>, vector<128x128xbf16>, vector<8x128xf32> -> vector<8x128xf32>
    %c0_3 = arith.constant 0 : index
    %c0_4 = arith.constant 0 : index
    %4 = vector.load %arg3[%c0_3, %c0_4] : memref<1x128xf32, #tpu.memory_space<vmem>>, vector<1x128xf32>
    %5 = vector.broadcast %4 : vector<1x128xf32> to vector<8x128xf32>
    %6 = arith.addf %3, %5 : vector<8x128xf32>
    %cst_5 = arith.constant 0.000000e+00 : f32
    %7 = vector.broadcast %cst_5 : f32 to vector<8x128xf32>
    %8 = arith.maximumf %6, %7 : vector<8x128xf32>
    %9 = arith.truncf %8 : vector<8x128xf32> to vector<8x128xbf16>
    %c0_6 = arith.constant 0 : index
    %c0_7 = arith.constant 0 : index
    %10 = vector.load %arg4[%c0_6, %c0_7] : memref<128x128xbf16, #tpu.memory_space<vmem>>, vector<128x128xbf16>
    %cst_8 = arith.constant dense<0.000000e+00> : vector<8x128xf32>
    %11 = tpu.matmul %9, %10, %cst_8 {dimension_numbers = #tpu.dot_dimension_numbers<[1], [0], [0], [1], [0, 0, 1, 1], [], []>} : vector<8x128xbf16>, vector<128x128xbf16>, vector<8x128xf32> -> vector<8x128xf32>
    %c0_9 = arith.constant 0 : index
    %c0_10 = arith.constant 0 : index
    %12 = vector.load %arg5[%c0_9, %c0_10] : memref<1x128xf32, #tpu.memory_space<vmem>>, vector<1x128xf32>
    %13 = vector.broadcast %12 : vector<1x128xf32> to vector<8x128xf32>
    %14 = arith.addf %11, %13 : vector<8x128xf32>
    %15 = vector.extract_strided_slice %14 {offsets = [0, 0], sizes = [8, 32], strides = [1, 1]} : vector<8x128xf32> to vector<8x32xf32>
    %c0_11 = arith.constant 0 : index
    %c0_12 = arith.constant 0 : index
    %16 = vector.load %arg6[%c0_11, %c0_12] : memref<8x32xf32, #tpu.memory_space<vmem>>, vector<8x32xf32>
    tpu.vector_store %arg6[%c0_11, %c0_12], %15 {strides = array<i32>} : memref<8x32xf32, #tpu.memory_space<vmem>>, vector<8x32xf32>,
    return
  }
  func.func @transform_0(%arg0: i32) -> (i32, i32) {
    %c0_i32 = arith.constant 0 : i32
    %c0_i32_0 = arith.constant 0 : i32
    return %arg0, %c0_i32 : i32, i32
  }
  func.func @transform_1(%arg0: i32) -> (i32, i32) {
    %c0_i32 = arith.constant 0 : i32
    %c0_i32_0 = arith.constant 0 : i32
    %c0_i32_1 = arith.constant 0 : i32
    return %c0_i32, %c0_i32_0 : i32, i32
  }
  func.func @transform_2(%arg0: i32) -> (i32, i32) {
    %c0_i32 = arith.constant 0 : i32
    %c0_i32_0 = arith.constant 0 : i32
    %c0_i32_1 = arith.constant 0 : i32
    return %c0_i32, %c0_i32_0 : i32, i32
  }
  func.func @transform_3(%arg0: i32) -> (i32, i32) {
    %c0_i32 = arith.constant 0 : i32
    %c0_i32_0 = arith.constant 0 : i32
    %c0_i32_1 = arith.constant 0 : i32
    return %c0_i32, %c0_i32_0 : i32, i32
  }
  func.func @transform_4(%arg0: i32) -> (i32, i32) {
    %c0_i32 = arith.constant 0 : i32
    %c0_i32_0 = arith.constant 0 : i32
    %c0_i32_1 = arith.constant 0 : i32
    return %c0_i32, %c0_i32_0 : i32, i32
  }
  func.func @transform_5(%arg0: i32) -> (i32, i32) {
    %c0_i32 = arith.constant 0 : i32
    %c0_i32_0 = arith.constant 0 : i32
    return %arg0, %c0_i32 : i32, i32
  }
}

</mosaic_0001>

<llo_original>
// kernel: tpu_custom_call.1
$region0: #{tpu_custom_call.1}
  #allocation0 [shape = 'u32[]', space=smem, size = 0x4, offset = 0x4, fixed_abs, tag = 'smem constant byte address 0x4 - core index']
  #allocation1 [shape = 'u32[72,128]{1,0:T(1,128)}', space=vmem, size = 0x9000, scoped, tag = 'internal scratch']
  %s0 = inlined_call_operand.hbm [shape: f32[8,128], index: 0, kind: input, shape index: {}]
  %s1 = inlined_call_operand.hbm [shape: bf16[128,128], index: 1, kind: input, shape index: {}]
  %s2 = inlined_call_operand.vmem [shape: f32[1,128], index: 2, kind: input, shape index: {}]
  %s3 = inlined_call_operand.hbm [shape: bf16[128,128], index: 3, kind: input, shape index: {}]
  %s4 = inlined_call_operand.vmem [shape: f32[1,128], index: 4, kind: input, shape index: {}]
  %s5 = inlined_call_operand.hbm [shape: f32[8,32], index: 5, kind: output, shape index: {}]
  %s6 = sld [smem:[#allocation0]]
  $region42: #{tpu_custom_call.1} parent=0
    _
  %s8 = ssub.s32 1, %s6
  %s9 = scalar_select 0, %s8, %s6
  $region1: #{tpu_custom_call.1} parent=0
    #allocation2 [shape = 'u8[4096]{0}', space=vmem, size = 0x1000, scoped, tag = 'input window, operand 0, single buffered']
    #allocation3 [shape = 's32[1]{0}', space=sflag, size = 0x4, scoped, tag = 'scoped memory for tpu_custom_call.1']
    #allocation4 [shape = 's32[1]{0}', space=sflag, size = 0x4, scoped, tag = 'scoped memory for tpu_custom_call.1']
    #allocation5 [shape = 'u8[32768]{0}', space=vmem, size = 0x8000, scoped, tag = 'input window, operand 1, single buffered']
    #allocation6 [shape = 's32[1]{0}', space=sflag, size = 0x4, scoped, tag = 'scoped memory for tpu_custom_call.1']
    #allocation7 [shape = 'u8[32768]{0}', space=vmem, size = 0x8000, scoped, tag = 'input window, operand 3, single buffered']
    #allocation8 [shape = 'u8[4096]{0}', space=vmem, size = 0x1000, scoped, tag = 'output window, operand 0, single buffered']
    %10 = vsyncpa [#allocation3], 0
    %11 = vsyncpa [#allocation6], 0
    %12 = vsyncpa [#allocation4], 0
    // Predicated region
    $region2: #{tpu_custom_call.1} parent=1 // pred_check
      _
    $region3: #{tpu_custom_call.1} parent=1 // pred_check_branch
      %14 = sbr.rel (0) target = $region5
    $region4: #{tpu_custom_call.1} parent=1 // pred_region
      %16 = vsyncadd [#allocation3], 0
      %s18 = sshll.u32 %s0, 4
      %s19 = int_to_ptr.hbm [resolvable:$true] %s18
      %s20 = sshll.u32 [#allocation2], 4
      %s21 = int_to_ptr.vmem [resolvable:$true] %s20
      %23 = dma.hbm_to_vmem [thread:$0]  %s19, 128, %s21, [#allocation3]
    $region5: #{tpu_custom_call.1} parent=1 // pred_fallthru
      _
    // Predicated region
    $region6: #{tpu_custom_call.1} parent=1 // pred_check
      _
    $region7: #{tpu_custom_call.1} parent=1 // pred_check_branch
      %25 = sbr.rel (0) target = $region9
    $region8: #{tpu_custom_call.1} parent=1 // pred_region
      %27 = vsyncadd [#allocation6], 0
      %s28 = sshll.u32 %s1, 4
      %s29 = int_to_ptr.hbm [resolvable:$true] %s28
      %s30 = sshll.u32 [#allocation5], 4
      %s31 = int_to_ptr.vmem [resolvable:$true] %s30
      %36 = dma.hbm_to_vmem [thread:$0]  %s29, 1024, %s31, [#allocation6], 64, 64, 4
    $region9: #{tpu_custom_call.1} parent=1 // pred_fallthru
      _
    // Predicated region
    $region10: #{tpu_custom_call.1} parent=1 // pred_check
      _
    $region11: #{tpu_custom_call.1} parent=1 // pred_check_branch
      %38 = sbr.rel (0) target = $region13
    $region12: #{tpu_custom_call.1} parent=1 // pred_region
      _
    $region13: #{tpu_custom_call.1} parent=1 // pred_fallthru
      _
    // Predicated region
    $region14: #{tpu_custom_call.1} parent=1 // pred_check
      _
    $region15: #{tpu_custom_call.1} parent=1 // pred_check_branch
      %40 = sbr.rel (0) target = $region17
    $region16: #{tpu_custom_call.1} parent=1 // pred_region
      %42 = vsyncadd [#allocation6], 0
      %s43 = sshll.u32 %s3, 4
      %s44 = int_to_ptr.hbm [resolvable:$true] %s43
      %s45 = sshll.u32 [#allocation7], 4
      %s46 = int_to_ptr.vmem [resolvable:$true] %s45
      %51 = dma.hbm_to_vmem [thread:$0]  %s44, 1024, %s46, [#allocation6], 64, 64, 4
    $region17: #{tpu_custom_call.1} parent=1 // pred_fallthru
      _
    // Predicated region
    $region18: #{tpu_custom_call.1} parent=1 // pred_check
      _
    $region19: #{tpu_custom_call.1} parent=1 // pred_check_branch
      %53 = sbr.rel (0) target = $region21
    $region20: #{tpu_custom_call.1} parent=1 // pred_region
      _
    $region21: #{tpu_custom_call.1} parent=1 // pred_fallthru
      _
    // Predicated region
    $region22: #{tpu_custom_call.1} parent=1 // pred_check
      _
    $region23: #{tpu_custom_call.1} parent=1 // pred_check_branch
      %55 = sbr.rel (0) target = $region25
    $region24: #{tpu_custom_call.1} parent=1 // pred_region
      %57 = dma.done [#allocation3], 128
    $region25: #{tpu_custom_call.1} parent=1 // pred_fallthru
      _
    // Predicated region
    $region26: #{tpu_custom_call.1} parent=1 // pred_check
      _
    $region27: #{tpu_custom_call.1} parent=1 // pred_check_branch
      %59 = sbr.rel (0) target = $region29
    $region28: #{tpu_custom_call.1} parent=1 // pred_region
      %61 = dma.done [#allocation6], 1024
    $region29: #{tpu_custom_call.1} parent=1 // pred_fallthru
      _
    // Predicated region
    $region30: #{tpu_custom_call.1} parent=1 // pred_check
      _
    $region31: #{tpu_custom_call.1} parent=1 // pred_check_branch
      %63 = sbr.rel (0) target = $region33
    $region32: #{tpu_custom_call.1} parent=1 // pred_region
      %65 = dma.done [#allocation6], 1024
    $region33: #{tpu_custom_call.1} parent=1 // pred_fallthru
      _
    %v66 = vld [vmem:[#allocation2] sm:$0xff]
    %v67 = vpack.c.bf16 %v66, %v66
    %v68 = vld [vmem:[#allocation5] sm:$0xf]
    %v69 = vld [vmem:[#allocation5 + $0x4] sm:$0xf]
    %v70 = vld [vmem:[#allocation5 + $0x8] sm:$0xf]
    %v71 = vld [vmem:[#allocation5 + $0xc] sm:$0xf]
    %v72 = vld [vmem:[#allocation5 + $0x10] sm:$0xf]
    %v73 = vld [vmem:[#allocation5 + $0x14] sm:$0xf]
    %v74 = vld [vmem:[#allocation5 + $0x18] sm:$0xf]
    %v75 = vld [vmem:[#allocation5 + $0x1c] sm:$0xf]
    %v76 = vld [vmem:[#allocation5 + $0x20] sm:$0xf]
    %v77 = vld [vmem:[#allocation5 + $0x24] sm:$0xf]
    %v78 = vld [vmem:[#allocation5 + $0x28] sm:$0xf]
    %v79 = vld [vmem:[#allocation5 + $0x2c] sm:$0xf]
    %v80 = vld [vmem:[#allocation5 + $0x30] sm:$0xf]
    %v81 = vld [vmem:[#allocation5 + $0x34] sm:$0xf]
    %v82 = vld [vmem:[#allocation5 + $0x38] sm:$0xf]
    %v83 = vld [vmem:[#allocation5 + $0x3c] sm:$0xf]
    %v84 = vld [vmem:[%s2] sm:$0x1]
    %v86 = vperm.slane %v84, 0
    %v104 = vunpack.c.l.b16 %v68
    %v105 = vunpack.c.l.b16 %v69
    %v106 = vunpack.c.l.b16 %v70
    %v107 = vunpack.c.l.b16 %v71
    %v108 = vunpack.c.l.b16 %v72
    %v109 = vunpack.c.l.b16 %v73
    %v110 = vunpack.c.l.b16 %v74
    %v111 = vunpack.c.l.b16 %v75
    %v112 = vunpack.c.l.b16 %v76
    %v113 = vunpack.c.l.b16 %v77
    %v114 = vunpack.c.l.b16 %v78
    %v115 = vunpack.c.l.b16 %v79
    %v116 = vunpack.c.l.b16 %v80
    %v117 = vunpack.c.l.b16 %v81
    %v118 = vunpack.c.l.b16 %v82
    %v119 = vunpack.c.l.b16 %v83
    %v120 = vpack.c.b16 %v105, %v104
    %v121 = vpack.c.b16 %v107, %v106
    %v122 = vpack.c.b16 %v109, %v108
    %v123 = vpack.c.b16 %v111, %v110
    %v124 = vpack.c.b16 %v113, %v112
    %v125 = vpack.c.b16 %v115, %v114
    %v126 = vpack.c.b16 %v117, %v116
    %v127 = vpack.c.b16 %v119, %v118
    %136 = vmatpush.bf16.msra.mxu0 %v127
    %137 = vmatpush.bf16.msra.mxu0 %v126
    %138 = vmatpush.bf16.msra.mxu0 %v125
    %139 = vmatpush.bf16.msra.mxu0 %v124
    %140 = vmatpush.bf16.msra.mxu0 %v123
    %141 = vmatpush.bf16.msra.mxu0 %v122
    %142 = vmatpush.bf16.msra.mxu0 %v121
    %143 = vmatpush.bf16.msra.mxu0 %v120
    %144 = vmatmul.bf16.gmra.mxu0 %v67
    %v145 = vpop.f32.mrf.mxu0
    %v146 = vadd.f32 %v86, %v145
    %v147 = vpop.f32.mrf.mxu0
    %148 = vdwg.mxu0
    %v149 = vmax.f32 %v146, 0.0
    %v150 = vpack.c.bf16 %v149, %v149
    %v151 = vld [vmem:[#allocation7] sm:$0xf]
    %v152 = vld [vmem:[#allocation7 + $0x4] sm:$0xf]
    %v153 = vld [vmem:[#allocation7 + $0x8] sm:$0xf]
    %v154 = vld [vmem:[#allocation7 + $0xc] sm:$0xf]
    %v155 = vld [vmem:[#allocation7 + $0x10] sm:$0xf]
    %v156 = vld [vmem:[#allocation7 + $0x14] sm:$0xf]
    %v157 = vld [vmem:[#allocation7 + $0x18] sm:$0xf]
    %v158 = vld [vmem:[#allocation7 + $0x1c] sm:$0xf]
    %v159 = vld [vmem:[#allocation7 + $0x20] sm:$0xf]
    %v160 = vld [vmem:[#allocation7 + $0x24] sm:$0xf]
    %v161 = vld [vmem:[#allocation7 + $0x28] sm:$0xf]
    %v162 = vld [vmem:[#allocation7 + $0x2c] sm:$0xf]
    %v163 = vld [vmem:[#allocation7 + $0x30] sm:$0xf]
    %v164 = vld [vmem:[#allocation7 + $0x34] sm:$0xf]
    %v165 = vld [vmem:[#allocation7 + $0x38] sm:$0xf]
    %v166 = vld [vmem:[#allocation7 + $0x3c] sm:$0xf]
    %v167 = vld [vmem:[%s4] sm:$0x1]
    %v169 = vperm.slane %v167, 0
    %v187 = vunpack.c.l.b16 %v151
    %v188 = vunpack.c.l.b16 %v152
    %v189 = vunpack.c.l.b16 %v153
    %v190 = vunpack.c.l.b16 %v154
    %v191 = vunpack.c.l.b16 %v155
    %v192 = vunpack.c.l.b16 %v156
    %v193 = vunpack.c.l.b16 %v157
    %v194 = vunpack.c.l.b16 %v158
    %v195 = vunpack.c.l.b16 %v159
    %v196 = vunpack.c.l.b16 %v160
    %v197 = vunpack.c.l.b16 %v161
    %v198 = vunpack.c.l.b16 %v162
    %v199 = vunpack.c.l.b16 %v163
    %v200 = vunpack.c.l.b16 %v164
    %v201 = vunpack.c.l.b16 %v165
    %v202 = vunpack.c.l.b16 %v166
    %v203 = vpack.c.b16 %v188, %v187
    %v204 = vpack.c.b16 %v190, %v189
    %v205 = vpack.c.b16 %v192, %v191
    %v206 = vpack.c.b16 %v194, %v193
    %v207 = vpack.c.b16 %v196, %v195
    %v208 = vpack.c.b16 %v198, %v197
    %v209 = vpack.c.b16 %v200, %v199
    %v210 = vpack.c.b16 %v202, %v201
    %219 = vmatpush.bf16.msra.mxu0 %v210
    %220 = vmatpush.bf16.msra.mxu0 %v209
    %221 = vmatpush.bf16.msra.mxu0 %v208
    %222 = vmatpush.bf16.msra.mxu0 %v207
    %223 = vmatpush.bf16.msra.mxu0 %v206
    %224 = vmatpush.bf16.msra.mxu0 %v205
    %225 = vmatpush.bf16.msra.mxu0 %v204
    %226 = vmatpush.bf16.msra.mxu0 %v203
    %227 = vmatmul.bf16.gmra.mxu0 %v150
    %v228 = vpop.f32.mrf.mxu0
    %v229 = vadd.f32 %v169, %v228
    %v230 = vpop.f32.mrf.mxu0
    %231 = vdwg.mxu0
    %vm232 = vcmask 261120
    %233 = vst.msk [vmem:[#allocation8] sm:$0xff] %vm232, %v229
    // Predicated region
    $region34: #{tpu_custom_call.1} parent=1 // pred_check
      _
    $region35: #{tpu_custom_call.1} parent=1 // pred_check_branch
      %235 = sbr.rel (0) target = $region37
    $region36: #{tpu_custom_call.1} parent=1 // pred_region
      %237 = vsyncadd [#allocation4], 0
      %s239 = sshll.u32 [#allocation8], 4
      %s240 = int_to_ptr.vmem [resolvable:$true] %s239
      %s241 = sshll.u32 %s5, 4
      %s242 = int_to_ptr.hbm [resolvable:$true] %s241
      %244 = dma.vmem_to_hbm [thread:$0]  %s240, 128, %s242, [#allocation4]
    $region37: #{tpu_custom_call.1} parent=1 // pred_fallthru
      _
    // Predicated region
    $region38: #{tpu_custom_call.1} parent=1 // pred_check
      _
    $region39: #{tpu_custom_call.1} parent=1 // pred_check_branch
      %246 = sbr.rel (0) target = $region41
    $region40: #{tpu_custom_call.1} parent=1 // pred_region
      %248 = dma.done [#allocation4], 128
    $region41: #{tpu_custom_call.1} parent=1 // pred_fallthru
      _
    %249 = vsyncpa [#allocation3], 1
    %250 = vsyncpa [#allocation6], 1
    %251 = vsyncpa [#allocation4], 1

// kernel: tpu_custom_call.1
$region0: #{tpu_custom_call.1}
  #allocation0 [shape = 'u32[]', space=smem, size = 0x4, offset = 0x4, fixed_abs, tag = 'smem constant byte address 0x4 - core index']
  #allocation1 [shape = 'u32[72,128]{1,0:T(1,128)}', space=vmem, size = 0x9000, scoped, tag = 'internal scratch']
  %s0 = inlined_call_operand.hbm [shape: f32[8,128], index: 0, kind: input, shape index: {}]
  %s1 = inlined_call_operand.hbm [shape: bf16[128,128], index: 1, kind: input, shape index: {}]
  %s2 = inlined_call_operand.vmem [shape: f32[1,128], index: 2, kind: input, shape index: {}]
  %s3 = inlined_call_operand.hbm [shape: bf16[128,128], index: 3, kind: input, shape index: {}]
  %s4 = inlined_call_operand.vmem [shape: f32[1,128], index: 4, kind: input, shape index: {}]
  %s5 = inlined_call_operand.hbm [shape: f32[8,32], index: 5, kind: output, shape index: {}]
  %s6 = sld [smem:[#allocation0]]
  $region42: #{tpu_custom_call.1} parent=0
    _
  %s8 = ssub.s32 1, %s6
  %s9 = scalar_select 0, %s8, %s6
  $region1: #{tpu_custom_call.1} parent=0
    #allocation2 [shape = 'u8[4096]{0}', space=vmem, size = 0x1000, scoped, tag = 'input window, operand 0, single buffered']
    #allocation3 [shape = 's32[1]{0}', space=sflag, size = 0x4, scoped, tag = 'scoped memory for tpu_custom_call.1']
    #allocation4 [shape = 's32[1]{0}', space=sflag, size = 0x4, scoped, tag = 'scoped memory for tpu_custom_call.1']
    #allocation5 [shape = 'u8[32768]{0}', space=vmem, size = 0x8000, scoped, tag = 'input window, operand 1, single buffered']
    #allocation6 [shape = 's32[1]{0}', space=sflag, size = 0x4, scoped, tag = 'scoped memory for tpu_custom_call.1']
    #allocation7 [shape = 'u8[32768]{0}', space=vmem, size = 0x8000, scoped, tag = 'input window, operand 3, single buffered']
    #allocation8 [shape = 'u8[4096]{0}', space=vmem, size = 0x1000, scoped, tag = 'output window, operand 0, single buffered']
    %10 = vsyncpa [#allocation3], 0
    %11 = vsyncpa [#allocation6], 0
    %12 = vsyncpa [#allocation4], 0
    // Predicated region
    $region2: #{tpu_custom_call.1} parent=1 // pred_check
      _
    $region3: #{tpu_custom_call.1} parent=1 // pred_check_branch
      %14 = sbr.rel (0) target = $region5
    $region4: #{tpu_custom_call.1} parent=1 // pred_region
      %16 = vsyncadd [#allocation3], 0
      %s18 = sshll.u32 %s0, 4
      %s19 = int_to_ptr.hbm [resolvable:$true] %s18
      %s20 = sshll.u32 [#allocation2], 4
      %s21 = int_to_ptr.vmem [resolvable:$true] %s20
      %23 = dma.hbm_to_vmem [thread:$0]  %s19, 128, %s21, [#allocation3]
    $region5: #{tpu_custom_call.1} parent=1 // pred_fallthru
      _
    // Predicated region
    $region6: #{tpu_custom_call.1} parent=1 // pred_check
      _
    $region7: #{tpu_custom_call.1} parent=1 // pred_check_branch
      %25 = sbr.rel (0) target = $region9
    $region8: #{tpu_custom_call.1} parent=1 // pred_region
      %27 = vsyncadd [#allocation6], 0
      %s28 = sshll.u32 %s1, 4
      %s29 = int_to_ptr.hbm [resolvable:$true] %s28
      %s30 = sshll.u32 [#allocation5], 4
      %s31 = int_to_ptr.vmem [resolvable:$true] %s30
      %36 = dma.hbm_to_vmem [thread:$0]  %s29, 1024, %s31, [#allocation6], 64, 64, 4
    $region9: #{tpu_custom_call.1} parent=1 // pred_fallthru
      _
    // Predicated region
    $region10: #{tpu_custom_call.1} parent=1 // pred_check
      _
    $region11: #{tpu_custom_call.1} parent=1 // pred_check_branch
      %38 = sbr.rel (0) target = $region13
    $region12: #{tpu_custom_call.1} parent=1 // pred_region
      _
    $region13: #{tpu_custom_call.1} parent=1 // pred_fallthru
      _
    // Predicated region
    $region14: #{tpu_custom_call.1} parent=1 // pred_check
      _
    $region15: #{tpu_custom_call.1} parent=1 // pred_check_branch
      %40 = sbr.rel (0) target = $region17
    $region16: #{tpu_custom_call.1} parent=1 // pred_region
      %42 = vsyncadd [#allocation6], 0
      %s43 = sshll.u32 %s3, 4
      %s44 = int_to_ptr.hbm [resolvable:$true] %s43
      %s45 = sshll.u32 [#allocation7], 4
      %s46 = int_to_ptr.vmem [resolvable:$true] %s45
      %51 = dma.hbm_to_vmem [thread:$0]  %s44, 1024, %s46, [#allocation6], 64, 64, 4
    $region17: #{tpu_custom_call.1} parent=1 // pred_fallthru
      _
    // Predicated region
    $region18: #{tpu_custom_call.1} parent=1 // pred_check
      _
    $region19: #{tpu_custom_call.1} parent=1 // pred_check_branch
      %53 = sbr.rel (0) target = $region21
    $region20: #{tpu_custom_call.1} parent=1 // pred_region
      _
    $region21: #{tpu_custom_call.1} parent=1 // pred_fallthru
      _
    // Predicated region
    $region22: #{tpu_custom_call.1} parent=1 // pred_check
      _
    $region23: #{tpu_custom_call.1} parent=1 // pred_check_branch
      %55 = sbr.rel (0) target = $region25
    $region24: #{tpu_custom_call.1} parent=1 // pred_region
      %57 = dma.done [#allocation3], 128
    $region25: #{tpu_custom_call.1} parent=1 // pred_fallthru
      _
    // Predicated region
    $region26: #{tpu_custom_call.1} parent=1 // pred_check
      _
    $region27: #{tpu_custom_call.1} parent=1 // pred_check_branch
      %59 = sbr.rel (0) target = $region29
    $region28: #{tpu_custom_call.1} parent=1 // pred_region
      %61 = dma.done [#allocation6], 1024
    $region29: #{tpu_custom_call.1} parent=1 // pred_fallthru
      _
    // Predicated region
    $region30: #{tpu_custom_call.1} parent=1 // pred_check
      _
    $region31: #{tpu_custom_call.1} parent=1 // pred_check_branch
      %63 = sbr.rel (0) target = $region33
    $region32: #{tpu_custom_call.1} parent=1 // pred_region
      %65 = dma.done [#allocation6], 1024
    $region33: #{tpu_custom_call.1} parent=1 // pred_fallthru
      _
    %v66 = vld [vmem:[#allocation2] sm:$0xff]
    %v67 = vpack.c.bf16 %v66, %v66
    %v68 = vld [vmem:[#allocation5] sm:$0xf]
    %v69 = vld [vmem:[#allocation5 + $0x4] sm:$0xf]
    %v70 = vld [vmem:[#allocation5 + $0x8] sm:$0xf]
    %v71 = vld [vmem:[#allocation5 + $0xc] sm:$0xf]
    %v72 = vld [vmem:[#allocation5 + $0x10] sm:$0xf]
    %v73 = vld [vmem:[#allocation5 + $0x14] sm:$0xf]
    %v74 = vld [vmem:[#allocation5 + $0x18] sm:$0xf]
    %v75 = vld [vmem:[#allocation5 + $0x1c] sm:$0xf]
    %v76 = vld [vmem:[#allocation5 + $0x20] sm:$0xf]
    %v77 = vld [vmem:[#allocation5 + $0x24] sm:$0xf]
    %v78 = vld [vmem:[#allocation5 + $0x28] sm:$0xf]
    %v79 = vld [vmem:[#allocation5 + $0x2c] sm:$0xf]
    %v80 = vld [vmem:[#allocation5 + $0x30] sm:$0xf]
    %v81 = vld [vmem:[#allocation5 + $0x34] sm:$0xf]
    %v82 = vld [vmem:[#allocation5 + $0x38] sm:$0xf]
    %v83 = vld [vmem:[#allocation5 + $0x3c] sm:$0xf]
    %v84 = vld [vmem:[%s2] sm:$0x1]
    %v86 = vperm.slane %v84, 0
    %v104 = vunpack.c.l.b16 %v68
    %v105 = vunpack.c.l.b16 %v69
    %v106 = vunpack.c.l.b16 %v70
    %v107 = vunpack.c.l.b16 %v71
    %v108 = vunpack.c.l.b16 %v72
    %v109 = vunpack.c.l.b16 %v73
    %v110 = vunpack.c.l.b16 %v74
    %v111 = vunpack.c.l.b16 %v75
    %v112 = vunpack.c.l.b16 %v76
    %v113 = vunpack.c.l.b16 %v77
    %v114 = vunpack.c.l.b16 %v78
    %v115 = vunpack.c.l.b16 %v79
    %v116 = vunpack.c.l.b16 %v80
    %v117 = vunpack.c.l.b16 %v81
    %v118 = vunpack.c.l.b16 %v82
    %v119 = vunpack.c.l.b16 %v83
    %v120 = vpack.c.b16 %v105, %v104
    %v121 = vpack.c.b16 %v107, %v106
    %v122 = vpack.c.b16 %v109, %v108
    %v123 = vpack.c.b16 %v111, %v110
    %v124 = vpack.c.b16 %v113, %v112
    %v125 = vpack.c.b16 %v115, %v114
    %v126 = vpack.c.b16 %v117, %v116
    %v127 = vpack.c.b16 %v119, %v118
    %136 = vmatpush.bf16.msra.mxu0 %v127
    %137 = vmatpush.bf16.msra.mxu0 %v126
    %138 = vmatpush.bf16.msra.mxu0 %v125
    %139 = vmatpush.bf16.msra.mxu0 %v124
    %140 = vmatpush.bf16.msra.mxu0 %v123
    %141 = vmatpush.bf16.msra.mxu0 %v122
    %142 = vmatpush.bf16.msra.mxu0 %v121
    %143 = vmatpush.bf16.msra.mxu0 %v120
    %144 = vmatmul.bf16.gmra.mxu0 %v67
    %v145 = vpop.f32.mrf.mxu0
    %v146 = vadd.f32 %v86, %v145
    %v147 = vpop.f32.mrf.mxu0
    %148 = vdwg.mxu0
    %v149 = vmax.f32 %v146, 0.0
    %v150 = vpack.c.bf16 %v149, %v149
    %v151 = vld [vmem:[#allocation7] sm:$0xf]
    %v152 = vld [vmem:[#allocation7 + $0x4] sm:$0xf]
    %v153 = vld [vmem:[#allocation7 + $0x8] sm:$0xf]
    %v154 = vld [vmem:[#allocation7 + $0xc] sm:$0xf]
    %v155 = vld [vmem:[#allocation7 + $0x10] sm:$0xf]
    %v156 = vld [vmem:[#allocation7 + $0x14] sm:$0xf]
    %v157 = vld [vmem:[#allocation7 + $0x18] sm:$0xf]
    %v158 = vld [vmem:[#allocation7 + $0x1c] sm:$0xf]
    %v159 = vld [vmem:[#allocation7 + $0x20] sm:$0xf]
    %v160 = vld [vmem:[#allocation7 + $0x24] sm:$0xf]
    %v161 = vld [vmem:[#allocation7 + $0x28] sm:$0xf]
    %v162 = vld [vmem:[#allocation7 + $0x2c] sm:$0xf]
    %v163 = vld [vmem:[#allocation7 + $0x30] sm:$0xf]
    %v164 = vld [vmem:[#allocation7 + $0x34] sm:$0xf]
    %v165 = vld [vmem:[#allocation7 + $0x38] sm:$0xf]
    %v166 = vld [vmem:[#allocation7 + $0x3c] sm:$0xf]
    %v167 = vld [vmem:[%s4] sm:$0x1]
    %v169 = vperm.slane %v167, 0
    %v187 = vunpack.c.l.b16 %v151
    %v188 = vunpack.c.l.b16 %v152
    %v189 = vunpack.c.l.b16 %v153
    %v190 = vunpack.c.l.b16 %v154
    %v191 = vunpack.c.l.b16 %v155
    %v192 = vunpack.c.l.b16 %v156
    %v193 = vunpack.c.l.b16 %v157
    %v194 = vunpack.c.l.b16 %v158
    %v195 = vunpack.c.l.b16 %v159
    %v196 = vunpack.c.l.b16 %v160
    %v197 = vunpack.c.l.b16 %v161
    %v198 = vunpack.c.l.b16 %v162
    %v199 = vunpack.c.l.b16 %v163
    %v200 = vunpack.c.l.b16 %v164
    %v201 = vunpack.c.l.b16 %v165
    %v202 = vunpack.c.l.b16 %v166
    %v203 = vpack.c.b16 %v188, %v187
    %v204 = vpack.c.b16 %v190, %v189
    %v205 = vpack.c.b16 %v192, %v191
    %v206 = vpack.c.b16 %v194, %v193
    %v207 = vpack.c.b16 %v196, %v195
    %v208 = vpack.c.b16 %v198, %v197
    %v209 = vpack.c.b16 %v200, %v199
    %v210 = vpack.c.b16 %v202, %v201
    %219 = vmatpush.bf16.msra.mxu0 %v210
    %220 = vmatpush.bf16.msra.mxu0 %v209
    %221 = vmatpush.bf16.msra.mxu0 %v208
    %222 = vmatpush.bf16.msra.mxu0 %v207
    %223 = vmatpush.bf16.msra.mxu0 %v206
    %224 = vmatpush.bf16.msra.mxu0 %v205
    %225 = vmatpush.bf16.msra.mxu0 %v204
    %226 = vmatpush.bf16.msra.mxu0 %v203
    %227 = vmatmul.bf16.gmra.mxu0 %v150
    %v228 = vpop.f32.mrf.mxu0
    %v229 = vadd.f32 %v169, %v228
    %v230 = vpop.f32.mrf.mxu0
    %231 = vdwg.mxu0
    %vm232 = vcmask 261120
    %233 = vst.msk [vmem:[#allocation8] sm:$0xff] %vm232, %v229
    // Predicated region
    $region34: #{tpu_custom_call.1} parent=1 // pred_check
      _
    $region35: #{tpu_custom_call.1} parent=1 // pred_check_branch
      %235 = sbr.rel (0) target = $region37
    $region36: #{tpu_custom_call.1} parent=1 // pred_region
      %237 = vsyncadd [#allocation4], 0
      %s239 = sshll.u32 [#allocation8], 4
      %s240 = int_to_ptr.vmem [resolvable:$true] %s239
      %s241 = sshll.u32 %s5, 4
      %s242 = int_to_ptr.hbm [resolvable:$true] %s241
      %244 = dma.vmem_to_hbm [thread:$0]  %s240, 128, %s242, [#allocation4]
    $region37: #{tpu_custom_call.1} parent=1 // pred_fallthru
      _
    // Predicated region
    $region38: #{tpu_custom_call.1} parent=1 // pred_check
      _
    $region39: #{tpu_custom_call.1} parent=1 // pred_check_branch
      %246 = sbr.rel (0) target = $region41
    $region40: #{tpu_custom_call.1} parent=1 // pred_region
      %248 = dma.done [#allocation4], 128
    $region41: #{tpu_custom_call.1} parent=1 // pred_fallthru
      _
    %249 = vsyncpa [#allocation3], 1
    %250 = vsyncpa [#allocation6], 1
    %251 = vsyncpa [#allocation4], 1

</llo_original>
